<compile_context>
chip_gen: v5e
topology: v5e:2x2
jax: 0.10.0
libtpu: 0.0.40
codegen_flags: <defaults>
</compile_context>

<pallas_src>
import jax
import jax.numpy as jnp
from jax import lax
from jax.experimental import pallas as pl
from jax.experimental.pallas import tpu as pltpu

VOCAB = 128   # vocabulary size V (lane-aligned)
HIDDEN = 32   # hidden size D


# ----------------------------------------------------------------------------
# The single fused kernel
#   inputs : ids [B,S] i32, prompt one-hot column [B*S,1] i32,
#            embed [V,D] f32, w [D,V] f32, bias [1,V] f32, gumbel*temp [L*B,V] f32
#   outputs: generated tokens [B*L,1] i32, logits [B*(S+L-1), V] f32
#   scratch: logits table [V,V] f32 (VMEM resident)
# ----------------------------------------------------------------------------
def _infer_kernel(ids_ref, pcol_ref, e_ref, w_ref, b_ref, g_ref,
                  gen_ref, logits_ref, table_ref):
    B, S = ids_ref.shape
    V = w_ref.shape[1]
    L = gen_ref.shape[0] // B
    T = logits_ref.shape[0] // B          # = S + L - 1

    # -- prologue 1: one-time logits table  table = Embed @ W + b  ([V,V], VMEM) --
    table_ref[...] = (
        jnp.dot(e_ref[...], w_ref[...], preferred_element_type=jnp.float32)
        + b_ref[...]
    )

    # -- prologue 2: logits for prompt positions 0..S-1 (one one-hot matmul) --
    lane_p = lax.broadcasted_iota(jnp.int32, (B * S, V), 1)
    ohp = (lane_p == pcol_ref[...]).astype(jnp.float32)            # [B*S, V]
    plog = jnp.dot(ohp, table_ref[...], preferred_element_type=jnp.float32)
    for b in range(B):                                             # B is tiny & static
        logits_ref[pl.ds(b * T, S), :] = plog[b * S:(b + 1) * S, :]

    # -- generation loop: L sequential steps fully inside the kernel (no grid) --
    lane = lax.broadcasted_iota(jnp.int32, (B, V), 1)
    idx0 = ids_ref[:, pl.ds(S - 1, 1)]                             # last prompt token [B,1]

    def step(j, idx):
        # logits of the current last token == logits row at position S-1+j
        onehot = (lane == idx).astype(jnp.float32)                 # [B, V]
        logits = jnp.dot(onehot, table_ref[...],
                         preferred_element_type=jnp.float32)       # [B, V]
        for b in range(B):                                         # dynamic sublane stores
            logits_ref[pl.ds(b * T + S - 1 + j, 1), :] = logits[b:b + 1, :]

        # Gumbel-max categorical sample (noise already scaled by temperature).
        z = logits + g_ref[pl.ds(j * B, B), :]                     # [B, V]
        zmax = jnp.max(z, axis=-1, keepdims=True)                  # [B, 1]
        new_idx = jnp.min(jnp.where(z >= zmax, lane, V),
                          axis=-1, keepdims=True)                  # [B, 1] int32

        for b in range(B):                                         # single-token store
            gen_ref[pl.ds(b * L + j, 1), :] = new_idx[b:b + 1, :]
        return new_idx

    lax.fori_loop(0, L, step, idx0, unroll=True)


# ----------------------------------------------------------------------------
# InferModel.forward equivalent
# ----------------------------------------------------------------------------
def infer_model_forward(input_ids, tensor_of_seq_len, temperature, params, key):
    """
    input_ids:         [B, S] int32
    tensor_of_seq_len: [*, L] (only shape[1] is used, as in the PyTorch module)
    temperature:       scalar float
    returns (input_ids_out [B, S+L] int32, logits [B, S+L-1, V] float32)
    """
    embed, w, b = params["embed"], params["w"], params["b"]
    B, S = input_ids.shape
    L = tensor_of_seq_len.shape[1]
    T = S + L - 1
    V = w.shape[1]

    ids32 = input_ids.astype(jnp.int32)
    pcol = ids32.reshape(B * S, 1)                                  # prompt token column

    # All Gumbel noise at once, pre-scaled by temperature (VMEM-resident in the kernel):
    # argmax(logits/t + g) == argmax(logits + t*g) for t > 0; t == 0 -> greedy.
    temp = jnp.asarray(temperature, jnp.float32)
    gumbel = jax.random.gumbel(key, (L * B, V), jnp.float32) * temp

    gen_flat, logits_flat = pl.pallas_call(
        _infer_kernel,
        out_shape=(
            jax.ShapeDtypeStruct((B * L, 1), jnp.int32),            # generated tokens
            jax.ShapeDtypeStruct((B * T, V), jnp.float32),          # final logits (flat)
        ),
        in_specs=[pl.BlockSpec(memory_space=pltpu.MemorySpace.VMEM)] * 6,
        out_specs=(
            pl.BlockSpec(memory_space=pltpu.MemorySpace.VMEM),
            pl.BlockSpec(memory_space=pltpu.MemorySpace.VMEM),
        ),
        scratch_shapes=[pltpu.VMEM((V, V), jnp.float32)],           # logits table
    )(
        ids32,
        pcol,
        embed.astype(jnp.float32),
        w.astype(jnp.float32),
        b.reshape(1, V).astype(jnp.float32),
        gumbel,
    )

    out_ids = jnp.concatenate([ids32, gen_flat.reshape(B, L)], axis=1)   # [B, S+L]
    logits = logits_flat.reshape(B, T, V)                                # [B, S+L-1, V]
    return out_ids, logits


# ----------------------------------------------------------------------------
def init_params(key):
    k1, k2, k3 = jax.random.split(key, 3)
    embed = 0.02 * jax.random.normal(k1, (VOCAB, HIDDEN), jnp.float32)
    w = 0.02 * jax.random.normal(k2, (HIDDEN, VOCAB), jnp.float32)
    b = 0.01 * jax.random.normal(k3, (VOCAB,), jnp.float32)
    return {"embed": embed, "w": w, "b": b}


if __name__ == "__main__":
    root = jax.random.PRNGKey(0)
    k_param, k_ids, k_sample = jax.random.split(root, 3)

    params = init_params(k_param)

    B, S, L = 2, 8, 4
    input_ids = jax.random.randint(k_ids, (B, S), 0, VOCAB, dtype=jnp.int32)
    tensor_of_seq_len = jnp.zeros((1, L), jnp.int32)   # only shape[1] matters
    temperature = jnp.float32(0.8)

    fwd = jax.jit(infer_model_forward)
    out_ids, out_logits = fwd(input_ids, tensor_of_seq_len, temperature, params, k_sample)
    jax.block_until_ready((out_ids, out_logits))

    # structural checks
    assert out_ids.shape == (B, S + L) and out_ids.dtype == jnp.int32
    assert out_logits.shape == (B, S + L - 1, VOCAB) and out_logits.dtype == jnp.float32
    # prompt must be preserved and all generated tokens in-range
    assert bool(jnp.all(out_ids[:, :S] == input_ids))
    assert bool(jnp.all((out_ids >= 0) & (out_ids < VOCAB)))
    # logits must match the position-wise model (embed @ W + b table lookup)
    ref_table = params["embed"] @ params["w"] + params["b"]
    ref_logits = jnp.take(ref_table, out_ids[:, : S + L - 1], axis=0)
    assert bool(jnp.allclose(out_logits, ref_logits, atol=1e-2, rtol=1e-2))

    print("KERNEL_OK")
</pallas_src>

<mosaic_0001>
module attributes {stable_mosaic.version = 11 : i64} {
  func.func @_infer_kernel(%arg0: memref<2x8xi32, #tpu.memory_space<vmem>>, %arg1: memref<16x1xi32, #tpu.memory_space<vmem>>, %arg2: memref<128x32xf32, #tpu.memory_space<vmem>>, %arg3: memref<32x128xf32, #tpu.memory_space<vmem>>, %arg4: memref<1x128xf32, #tpu.memory_space<vmem>>, %arg5: memref<8x128xf32, #tpu.memory_space<vmem>>, %arg6: memref<8x1xi32, #tpu.memory_space<vmem>>, %arg7: memref<22x128xf32, #tpu.memory_space<vmem>>, %arg8: memref<128x128xf32, #tpu.memory_space<vmem>>) attributes {dimension_semantics = [], scalar_prefetch = 0 : i64, scratch_operands = 1 : i64, tpu.core_type = #tpu.core_type<tc>} {
    %c0 = arith.constant 0 : index
    %c0_0 = arith.constant 0 : index
    %0 = vector.load %arg2[%c0, %c0_0] : memref<128x32xf32, #tpu.memory_space<vmem>>, vector<128x32xf32>
    %c0_1 = arith.constant 0 : index
    %c0_2 = arith.constant 0 : index
    %1 = vector.load %arg3[%c0_1, %c0_2] : memref<32x128xf32, #tpu.memory_space<vmem>>, vector<32x128xf32>
    %cst = arith.constant dense<0.000000e+00> : vector<128x128xf32>
    %2 = tpu.matmul %0, %1, %cst {dimension_numbers = #tpu.dot_dimension_numbers<[1], [0], [0], [1], [0, 0, 1, 1], [], []>} : vector<128x32xf32>, vector<32x128xf32>, vector<128x128xf32> -> vector<128x128xf32>
    %c0_3 = arith.constant 0 : index
    %c0_4 = arith.constant 0 : index
    %3 = vector.load %arg4[%c0_3, %c0_4] : memref<1x128xf32, #tpu.memory_space<vmem>>, vector<1x128xf32>
    %4 = vector.broadcast %3 : vector<1x128xf32> to vector<128x128xf32>
    %5 = arith.addf %2, %4 : vector<128x128xf32>
    %c0_5 = arith.constant 0 : index
    %c0_6 = arith.constant 0 : index
    %6 = vector.load %arg8[%c0_5, %c0_6] : memref<128x128xf32, #tpu.memory_space<vmem>>, vector<128x128xf32>
    tpu.vector_store %arg8[%c0_5, %c0_6], %5 {strides = array<i32>} : memref<128x128xf32, #tpu.memory_space<vmem>>, vector<128x128xf32>,
    %7 = tpu.iota {dimensions = array<i32: 1>} : vector<16x128xi32>
    %c0_7 = arith.constant 0 : index
    %c0_8 = arith.constant 0 : index
    %8 = vector.load %arg1[%c0_7, %c0_8] : memref<16x1xi32, #tpu.memory_space<vmem>>, vector<16x1xi32>
    %9 = vector.broadcast %8 : vector<16x1xi32> to vector<16x128xi32>
    %10 = arith.cmpi eq, %7, %9 : vector<16x128xi32>
    %11 = arith.extui %10 : vector<16x128xi1> to vector<16x128xi32>
    %12 = arith.sitofp %11 : vector<16x128xi32> to vector<16x128xf32>
    %c0_9 = arith.constant 0 : index
    %c0_10 = arith.constant 0 : index
    %13 = vector.load %arg8[%c0_9, %c0_10] : memref<128x128xf32, #tpu.memory_space<vmem>>, vector<128x128xf32>
    %cst_11 = arith.constant dense<0.000000e+00> : vector<16x128xf32>
    %14 = tpu.matmul %12, %13, %cst_11 {dimension_numbers = #tpu.dot_dimension_numbers<[1], [0], [0], [1], [0, 0, 1, 1], [], []>} : vector<16x128xf32>, vector<128x128xf32>, vector<16x128xf32> -> vector<16x128xf32>
    %15 = vector.extract_strided_slice %14 {offsets = [0, 0], sizes = [8, 128], strides = [1, 1]} : vector<16x128xf32> to vector<8x128xf32>
    %c0_12 = arith.constant 0 : index
    %c0_13 = arith.constant 0 : index
    %16 = vector.load %arg7[%c0_12, %c0_13] : memref<22x128xf32, #tpu.memory_space<vmem>>, vector<8x128xf32>
    tpu.vector_store %arg7[%c0_12, %c0_13], %15 {strides = array<i32>} : memref<22x128xf32, #tpu.memory_space<vmem>>, vector<8x128xf32>,
    %17 = vector.extract_strided_slice %14 {offsets = [8, 0], sizes = [8, 128], strides = [1, 1]} : vector<16x128xf32> to vector<8x128xf32>
    %c11 = arith.constant 11 : index
    %c0_14 = arith.constant 0 : index
    %18 = vector.load %arg7[%c11, %c0_14] : memref<22x128xf32, #tpu.memory_space<vmem>>, vector<8x128xf32>
    tpu.vector_store %arg7[%c11, %c0_14], %17 {strides = array<i32>} : memref<22x128xf32, #tpu.memory_space<vmem>>, vector<8x128xf32>,
    %19 = tpu.iota {dimensions = array<i32: 1>} : vector<2x128xi32>
    %c0_15 = arith.constant 0 : index
    %c7 = arith.constant 7 : index
    %20 = vector.load %arg0[%c0_15, %c7] : memref<2x8xi32, #tpu.memory_space<vmem>>, vector<2x1xi32>
    %c0_i32 = arith.constant 0 : i32
    %21 = vector.broadcast %20 : vector<2x1xi32> to vector<2x128xi32>
    %22 = arith.cmpi eq, %19, %21 : vector<2x128xi32>
    %23 = arith.extui %22 : vector<2x128xi1> to vector<2x128xi32>
    %24 = arith.sitofp %23 : vector<2x128xi32> to vector<2x128xf32>
    %c0_16 = arith.constant 0 : index
    %c0_17 = arith.constant 0 : index
    %25 = vector.load %arg8[%c0_16, %c0_17] : memref<128x128xf32, #tpu.memory_space<vmem>>, vector<128x128xf32>
    %cst_18 = arith.constant dense<0.000000e+00> : vector<2x128xf32>
    %26 = tpu.matmul %24, %25, %cst_18 {dimension_numbers = #tpu.dot_dimension_numbers<[1], [0], [0], [1], [0, 0, 1, 1], [], []>} : vector<2x128xf32>, vector<128x128xf32>, vector<2x128xf32> -> vector<2x128xf32>
    %27 = vector.extract_strided_slice %26 {offsets = [0, 0], sizes = [1, 128], strides = [1, 1]} : vector<2x128xf32> to vector<1x128xf32>
    %c7_i32 = arith.constant 7 : i32
    %28 = arith.addi %c7_i32, %c0_i32 : i32
    %29 = arith.index_cast %28 : i32 to index
    %c0_19 = arith.constant 0 : index
    %30 = vector.load %arg7[%29, %c0_19] : memref<22x128xf32, #tpu.memory_space<vmem>>, vector<1x128xf32>
    tpu.vector_store %arg7[%29, %c0_19], %27 {strides = array<i32>} : memref<22x128xf32, #tpu.memory_space<vmem>>, vector<1x128xf32>,
    %31 = vector.extract_strided_slice %26 {offsets = [1, 0], sizes = [1, 128], strides = [1, 1]} : vector<2x128xf32> to vector<1x128xf32>
    %c18_i32 = arith.constant 18 : i32
    %32 = arith.addi %c18_i32, %c0_i32 : i32
    %33 = arith.index_cast %32 : i32 to index
    %c0_20 = arith.constant 0 : index
    %34 = vector.load %arg7[%33, %c0_20] : memref<22x128xf32, #tpu.memory_space<vmem>>, vector<1x128xf32>
    tpu.vector_store %arg7[%33, %c0_20], %31 {strides = array<i32>} : memref<22x128xf32, #tpu.memory_space<vmem>>, vector<1x128xf32>,
    %c2_i32 = arith.constant 2 : i32
    %35 = arith.muli %c0_i32, %c2_i32 : i32
    %36 = arith.index_cast %35 : i32 to index
    %c0_21 = arith.constant 0 : index
    %37 = vector.load %arg5[%36, %c0_21] : memref<8x128xf32, #tpu.memory_space<vmem>>, vector<2x128xf32>
    %38 = arith.addf %26, %37 : vector<2x128xf32>
    %cst_22 = arith.constant dense<0xFF800000> : vector<2xf32>
    %39 = vector.multi_reduction <maximumf>, %38, %cst_22 [1] : vector<2x128xf32> to vector<2xf32>
    %40 = vector.shape_cast %39 : vector<2xf32> to vector<2x1xf32>
    %41 = vector.broadcast %40 : vector<2x1xf32> to vector<2x128xf32>
    %42 = arith.cmpf oge, %38, %41 : vector<2x128xf32>
    %c128_i32 = arith.constant 128 : i32
    %43 = vector.broadcast %c128_i32 : i32 to vector<2x128xi32>
    %44 = arith.select %42, %19, %43 : vector<2x128xi1>, vector<2x128xi32>
    %cst_23 = arith.constant dense<2147483647> : vector<2xi32>
    %45 = vector.multi_reduction <minsi>, %44, %cst_23 [1] : vector<2x128xi32> to vector<2xi32>
    %46 = vector.shape_cast %45 : vector<2xi32> to vector<2x1xi32>
    %47 = vector.extract_strided_slice %46 {offsets = [0, 0], sizes = [1, 1], strides = [1, 1]} : vector<2x1xi32> to vector<1x1xi32>
    %c0_i32_24 = arith.constant 0 : i32
    %48 = arith.addi %c0_i32_24, %c0_i32 : i32
    %49 = arith.index_cast %48 : i32 to index
    %c0_25 = arith.constant 0 : index
    %50 = vector.load %arg6[%49, %c0_25] : memref<8x1xi32, #tpu.memory_space<vmem>>, vector<1x1xi32>
    tpu.vector_store %arg6[%49, %c0_25], %47 {strides = array<i32>} : memref<8x1xi32, #tpu.memory_space<vmem>>, vector<1x1xi32>,
    %51 = vector.extract_strided_slice %46 {offsets = [1, 0], sizes = [1, 1], strides = [1, 1]} : vector<2x1xi32> to vector<1x1xi32>
    %c4_i32 = arith.constant 4 : i32
    %52 = arith.addi %c4_i32, %c0_i32 : i32
    %53 = arith.index_cast %52 : i32 to index
    %c0_26 = arith.constant 0 : index
    %54 = vector.load %arg6[%53, %c0_26] : memref<8x1xi32, #tpu.memory_space<vmem>>, vector<1x1xi32>
    tpu.vector_store %arg6[%53, %c0_26], %51 {strides = array<i32>} : memref<8x1xi32, #tpu.memory_space<vmem>>, vector<1x1xi32>,
    %c1_i32 = arith.constant 1 : i32
    %55 = vector.broadcast %46 : vector<2x1xi32> to vector<2x128xi32>
    %56 = arith.cmpi eq, %19, %55 : vector<2x128xi32>
    %57 = arith.extui %56 : vector<2x128xi1> to vector<2x128xi32>
    %58 = arith.sitofp %57 : vector<2x128xi32> to vector<2x128xf32>
    %c0_27 = arith.constant 0 : index
    %c0_28 = arith.constant 0 : index
    %59 = vector.load %arg8[%c0_27, %c0_28] : memref<128x128xf32, #tpu.memory_space<vmem>>, vector<128x128xf32>
    %cst_29 = arith.constant dense<0.000000e+00> : vector<2x128xf32>
    %60 = tpu.matmul %58, %59, %cst_29 {dimension_numbers = #tpu.dot_dimension_numbers<[1], [0], [0], [1], [0, 0, 1, 1], [], []>} : vector<2x128xf32>, vector<128x128xf32>, vector<2x128xf32> -> vector<2x128xf32>
    %61 = vector.extract_strided_slice %60 {offsets = [0, 0], sizes = [1, 128], strides = [1, 1]} : vector<2x128xf32> to vector<1x128xf32>
    %c7_i32_30 = arith.constant 7 : i32
    %62 = arith.addi %c7_i32_30, %c1_i32 : i32
    %63 = arith.index_cast %62 : i32 to index
    %c0_31 = arith.constant 0 : index
    %64 = vector.load %arg7[%63, %c0_31] : memref<22x128xf32, #tpu.memory_space<vmem>>, vector<1x128xf32>
    tpu.vector_store %arg7[%63, %c0_31], %61 {strides = array<i32>} : memref<22x128xf32, #tpu.memory_space<vmem>>, vector<1x128xf32>,
    %65 = vector.extract_strided_slice %60 {offsets = [1, 0], sizes = [1, 128], strides = [1, 1]} : vector<2x128xf32> to vector<1x128xf32>
    %c18_i32_32 = arith.constant 18 : i32
    %66 = arith.addi %c18_i32_32, %c1_i32 : i32
    %67 = arith.index_cast %66 : i32 to index
    %c0_33 = arith.constant 0 : index
    %68 = vector.load %arg7[%67, %c0_33] : memref<22x128xf32, #tpu.memory_space<vmem>>, vector<1x128xf32>
    tpu.vector_store %arg7[%67, %c0_33], %65 {strides = array<i32>} : memref<22x128xf32, #tpu.memory_space<vmem>>, vector<1x128xf32>,
    %c2_i32_34 = arith.constant 2 : i32
    %69 = arith.muli %c1_i32, %c2_i32_34 : i32
    %70 = arith.index_cast %69 : i32 to index
    %c0_35 = arith.constant 0 : index
    %71 = vector.load %arg5[%70, %c0_35] : memref<8x128xf32, #tpu.memory_space<vmem>>, vector<2x128xf32>
    %72 = arith.addf %60, %71 : vector<2x128xf32>
    %cst_36 = arith.constant dense<0xFF800000> : vector<2xf32>
    %73 = vector.multi_reduction <maximumf>, %72, %cst_36 [1] : vector<2x128xf32> to vector<2xf32>
    %74 = vector.shape_cast %73 : vector<2xf32> to vector<2x1xf32>
    %75 = vector.broadcast %74 : vector<2x1xf32> to vector<2x128xf32>
    %76 = arith.cmpf oge, %72, %75 : vector<2x128xf32>
    %c128_i32_37 = arith.constant 128 : i32
    %77 = vector.broadcast %c128_i32_37 : i32 to vector<2x128xi32>
    %78 = arith.select %76, %19, %77 : vector<2x128xi1>, vector<2x128xi32>
    %cst_38 = arith.constant dense<2147483647> : vector<2xi32>
    %79 = vector.multi_reduction <minsi>, %78, %cst_38 [1] : vector<2x128xi32> to vector<2xi32>
    %80 = vector.shape_cast %79 : vector<2xi32> to vector<2x1xi32>
    %81 = vector.extract_strided_slice %80 {offsets = [0, 0], sizes = [1, 1], strides = [1, 1]} : vector<2x1xi32> to vector<1x1xi32>
    %c0_i32_39 = arith.constant 0 : i32
    %82 = arith.addi %c0_i32_39, %c1_i32 : i32
    %83 = arith.index_cast %82 : i32 to index
    %c0_40 = arith.constant 0 : index
    %84 = vector.load %arg6[%83, %c0_40] : memref<8x1xi32, #tpu.memory_space<vmem>>, vector<1x1xi32>
    tpu.vector_store %arg6[%83, %c0_40], %81 {strides = array<i32>} : memref<8x1xi32, #tpu.memory_space<vmem>>, vector<1x1xi32>,
    %85 = vector.extract_strided_slice %80 {offsets = [1, 0], sizes = [1, 1], strides = [1, 1]} : vector<2x1xi32> to vector<1x1xi32>
    %c4_i32_41 = arith.constant 4 : i32
    %86 = arith.addi %c4_i32_41, %c1_i32 : i32
    %87 = arith.index_cast %86 : i32 to index
    %c0_42 = arith.constant 0 : index
    %88 = vector.load %arg6[%87, %c0_42] : memref<8x1xi32, #tpu.memory_space<vmem>>, vector<1x1xi32>
    tpu.vector_store %arg6[%87, %c0_42], %85 {strides = array<i32>} : memref<8x1xi32, #tpu.memory_space<vmem>>, vector<1x1xi32>,
    %c2_i32_43 = arith.constant 2 : i32
    %89 = vector.broadcast %80 : vector<2x1xi32> to vector<2x128xi32>
    %90 = arith.cmpi eq, %19, %89 : vector<2x128xi32>
    %91 = arith.extui %90 : vector<2x128xi1> to vector<2x128xi32>
    %92 = arith.sitofp %91 : vector<2x128xi32> to vector<2x128xf32>
    %c0_44 = arith.constant 0 : index
    %c0_45 = arith.constant 0 : index
    %93 = vector.load %arg8[%c0_44, %c0_45] : memref<128x128xf32, #tpu.memory_space<vmem>>, vector<128x128xf32>
    %cst_46 = arith.constant dense<0.000000e+00> : vector<2x128xf32>
    %94 = tpu.matmul %92, %93, %cst_46 {dimension_numbers = #tpu.dot_dimension_numbers<[1], [0], [0], [1], [0, 0, 1, 1], [], []>} : vector<2x128xf32>, vector<128x128xf32>, vector<2x128xf32> -> vector<2x128xf32>
    %95 = vector.extract_strided_slice %94 {offsets = [0, 0], sizes = [1, 128], strides = [1, 1]} : vector<2x128xf32> to vector<1x128xf32>
    %c7_i32_47 = arith.constant 7 : i32
    %96 = arith.addi %c7_i32_47, %c2_i32_43 : i32
    %97 = arith.index_cast %96 : i32 to index
    %c0_48 = arith.constant 0 : index
    %98 = vector.load %arg7[%97, %c0_48] : memref<22x128xf32, #tpu.memory_space<vmem>>, vector<1x128xf32>
    tpu.vector_store %arg7[%97, %c0_48], %95 {strides = array<i32>} : memref<22x128xf32, #tpu.memory_space<vmem>>, vector<1x128xf32>,
    %99 = vector.extract_strided_slice %94 {offsets = [1, 0], sizes = [1, 128], strides = [1, 1]} : vector<2x128xf32> to vector<1x128xf32>
    %c18_i32_49 = arith.constant 18 : i32
    %100 = arith.addi %c18_i32_49, %c2_i32_43 : i32
    %101 = arith.index_cast %100 : i32 to index
    %c0_50 = arith.constant 0 : index
    %102 = vector.load %arg7[%101, %c0_50] : memref<22x128xf32, #tpu.memory_space<vmem>>, vector<1x128xf32>
    tpu.vector_store %arg7[%101, %c0_50], %99 {strides = array<i32>} : memref<22x128xf32, #tpu.memory_space<vmem>>, vector<1x128xf32>,
    %c2_i32_51 = arith.constant 2 : i32
    %103 = arith.muli %c2_i32_43, %c2_i32_51 : i32
    %104 = arith.index_cast %103 : i32 to index
    %c0_52 = arith.constant 0 : index
    %105 = vector.load %arg5[%104, %c0_52] : memref<8x128xf32, #tpu.memory_space<vmem>>, vector<2x128xf32>
    %106 = arith.addf %94, %105 : vector<2x128xf32>
    %cst_53 = arith.constant dense<0xFF800000> : vector<2xf32>
    %107 = vector.multi_reduction <maximumf>, %106, %cst_53 [1] : vector<2x128xf32> to vector<2xf32>
    %108 = vector.shape_cast %107 : vector<2xf32> to vector<2x1xf32>
    %109 = vector.broadcast %108 : vector<2x1xf32> to vector<2x128xf32>
    %110 = arith.cmpf oge, %106, %109 : vector<2x128xf32>
    %c128_i32_54 = arith.constant 128 : i32
    %111 = vector.broadcast %c128_i32_54 : i32 to vector<2x128xi32>
    %112 = arith.select %110, %19, %111 : vector<2x128xi1>, vector<2x128xi32>
    %cst_55 = arith.constant dense<2147483647> : vector<2xi32>
    %113 = vector.multi_reduction <minsi>, %112, %cst_55 [1] : vector<2x128xi32> to vector<2xi32>
    %114 = vector.shape_cast %113 : vector<2xi32> to vector<2x1xi32>
    %115 = vector.extract_strided_slice %114 {offsets = [0, 0], sizes = [1, 1], strides = [1, 1]} : vector<2x1xi32> to vector<1x1xi32>
    %c0_i32_56 = arith.constant 0 : i32
    %116 = arith.addi %c0_i32_56, %c2_i32_43 : i32
    %117 = arith.index_cast %116 : i32 to index
    %c0_57 = arith.constant 0 : index
    %118 = vector.load %arg6[%117, %c0_57] : memref<8x1xi32, #tpu.memory_space<vmem>>, vector<1x1xi32>
    tpu.vector_store %arg6[%117, %c0_57], %115 {strides = array<i32>} : memref<8x1xi32, #tpu.memory_space<vmem>>, vector<1x1xi32>,
    %119 = vector.extract_strided_slice %114 {offsets = [1, 0], sizes = [1, 1], strides = [1, 1]} : vector<2x1xi32> to vector<1x1xi32>
    %c4_i32_58 = arith.constant 4 : i32
    %120 = arith.addi %c4_i32_58, %c2_i32_43 : i32
    %121 = arith.index_cast %120 : i32 to index
    %c0_59 = arith.constant 0 : index
    %122 = vector.load %arg6[%121, %c0_59] : memref<8x1xi32, #tpu.memory_space<vmem>>, vector<1x1xi32>
    tpu.vector_store %arg6[%121, %c0_59], %119 {strides = array<i32>} : memref<8x1xi32, #tpu.memory_space<vmem>>, vector<1x1xi32>,
    %c3_i32 = arith.constant 3 : i32
    %123 = vector.broadcast %114 : vector<2x1xi32> to vector<2x128xi32>
    %124 = arith.cmpi eq, %19, %123 : vector<2x128xi32>
    %125 = arith.extui %124 : vector<2x128xi1> to vector<2x128xi32>
    %126 = arith.sitofp %125 : vector<2x128xi32> to vector<2x128xf32>
    %c0_60 = arith.constant 0 : index
    %c0_61 = arith.constant 0 : index
    %127 = vector.load %arg8[%c0_60, %c0_61] : memref<128x128xf32, #tpu.memory_space<vmem>>, vector<128x128xf32>
    %cst_62 = arith.constant dense<0.000000e+00> : vector<2x128xf32>
    %128 = tpu.matmul %126, %127, %cst_62 {dimension_numbers = #tpu.dot_dimension_numbers<[1], [0], [0], [1], [0, 0, 1, 1], [], []>} : vector<2x128xf32>, vector<128x128xf32>, vector<2x128xf32> -> vector<2x128xf32>
    %129 = vector.extract_strided_slice %128 {offsets = [0, 0], sizes = [1, 128], strides = [1, 1]} : vector<2x128xf32> to vector<1x128xf32>
    %c7_i32_63 = arith.constant 7 : i32
    %130 = arith.addi %c7_i32_63, %c3_i32 : i32
    %131 = arith.index_cast %130 : i32 to index
    %c0_64 = arith.constant 0 : index
    %132 = vector.load %arg7[%131, %c0_64] : memref<22x128xf32, #tpu.memory_space<vmem>>, vector<1x128xf32>
    tpu.vector_store %arg7[%131, %c0_64], %129 {strides = array<i32>} : memref<22x128xf32, #tpu.memory_space<vmem>>, vector<1x128xf32>,
    %133 = vector.extract_strided_slice %128 {offsets = [1, 0], sizes = [1, 128], strides = [1, 1]} : vector<2x128xf32> to vector<1x128xf32>
    %c18_i32_65 = arith.constant 18 : i32
    %134 = arith.addi %c18_i32_65, %c3_i32 : i32
    %135 = arith.index_cast %134 : i32 to index
    %c0_66 = arith.constant 0 : index
    %136 = vector.load %arg7[%135, %c0_66] : memref<22x128xf32, #tpu.memory_space<vmem>>, vector<1x128xf32>
    tpu.vector_store %arg7[%135, %c0_66], %133 {strides = array<i32>} : memref<22x128xf32, #tpu.memory_space<vmem>>, vector<1x128xf32>,
    %c2_i32_67 = arith.constant 2 : i32
    %137 = arith.muli %c3_i32, %c2_i32_67 : i32
    %138 = arith.index_cast %137 : i32 to index
    %c0_68 = arith.constant 0 : index
    %139 = vector.load %arg5[%138, %c0_68] : memref<8x128xf32, #tpu.memory_space<vmem>>, vector<2x128xf32>
    %140 = arith.addf %128, %139 : vector<2x128xf32>
    %cst_69 = arith.constant dense<0xFF800000> : vector<2xf32>
    %141 = vector.multi_reduction <maximumf>, %140, %cst_69 [1] : vector<2x128xf32> to vector<2xf32>
    %142 = vector.shape_cast %141 : vector<2xf32> to vector<2x1xf32>
    %143 = vector.broadcast %142 : vector<2x1xf32> to vector<2x128xf32>
    %144 = arith.cmpf oge, %140, %143 : vector<2x128xf32>
    %c128_i32_70 = arith.constant 128 : i32
    %145 = vector.broadcast %c128_i32_70 : i32 to vector<2x128xi32>
    %146 = arith.select %144, %19, %145 : vector<2x128xi1>, vector<2x128xi32>
    %cst_71 = arith.constant dense<2147483647> : vector<2xi32>
    %147 = vector.multi_reduction <minsi>, %146, %cst_71 [1] : vector<2x128xi32> to vector<2xi32>
    %148 = vector.shape_cast %147 : vector<2xi32> to vector<2x1xi32>
    %149 = vector.extract_strided_slice %148 {offsets = [0, 0], sizes = [1, 1], strides = [1, 1]} : vector<2x1xi32> to vector<1x1xi32>
    %c0_i32_72 = arith.constant 0 : i32
    %150 = arith.addi %c0_i32_72, %c3_i32 : i32
    %151 = arith.index_cast %150 : i32 to index
    %c0_73 = arith.constant 0 : index
    %152 = vector.load %arg6[%151, %c0_73] : memref<8x1xi32, #tpu.memory_space<vmem>>, vector<1x1xi32>
    tpu.vector_store %arg6[%151, %c0_73], %149 {strides = array<i32>} : memref<8x1xi32, #tpu.memory_space<vmem>>, vector<1x1xi32>,
    %153 = vector.extract_strided_slice %148 {offsets = [1, 0], sizes = [1, 1], strides = [1, 1]} : vector<2x1xi32> to vector<1x1xi32>
    %c4_i32_74 = arith.constant 4 : i32
    %154 = arith.addi %c4_i32_74, %c3_i32 : i32
    %155 = arith.index_cast %154 : i32 to index
    %c0_75 = arith.constant 0 : index
    %156 = vector.load %arg6[%155, %c0_75] : memref<8x1xi32, #tpu.memory_space<vmem>>, vector<1x1xi32>
    tpu.vector_store %arg6[%155, %c0_75], %153 {strides = array<i32>} : memref<8x1xi32, #tpu.memory_space<vmem>>, vector<1x1xi32>,
    %c4_i32_76 = arith.constant 4 : i32
    return
  }
}

</mosaic_0001>

<llo_original>
// kernel: infer_model_forward.1
$region0: #{infer_model_forward.1}
  #allocation0 [shape = 'u32[]', space=smem, size = 0x4, offset = 0x4, fixed_abs, tag = 'smem constant byte address 0x4 - core index']
  #allocation1 [shape = 'u32[72,128]{1,0:T(1,128)}', space=vmem, size = 0x9000, scoped, tag = 'internal scratch']
  #allocation2 [shape = 'f32[128,128]{1,0:T(8,128)}', space=vmem, size = 0x10000, scoped, tag = 'scratch operand']
  %s0 = inlined_call_operand.vmem [shape: s32[2,8], index: 0, kind: input, shape index: {}]
  %s1 = inlined_call_operand.vmem [shape: s32[16,1], index: 1, kind: input, shape index: {}]
  %s2 = inlined_call_operand.vmem [shape: f32[128,32], index: 2, kind: input, shape index: {}]
  %s3 = inlined_call_operand.vmem [shape: f32[32,128], index: 3, kind: input, shape index: {}]
  %s4 = inlined_call_operand.vmem [shape: f32[1,128], index: 4, kind: input, shape index: {}]
  %s5 = inlined_call_operand.vmem [shape: f32[8,128], index: 5, kind: input, shape index: {}]
  %s6 = inlined_call_operand.vmem [shape: s32[8,1], index: 6, kind: output, shape index: {0}]
  %s7 = inlined_call_operand.vmem [shape: f32[22,128], index: 7, kind: output, shape index: {1}]
  %8 = xla_tuple %s6, %s7
  %s9 = sld [smem:[#allocation0]]
  $region42: #{infer_model_forward.1} parent=0
    _
  %s11 = ssub.s32 1, %s9
  %s12 = scalar_select 0, %s11, %s9
  // Predicated region
  $region2: #{infer_model_forward.1} parent=0 // pred_check
    _
  $region3: #{infer_model_forward.1} parent=0 // pred_check_branch
    %14 = sbr.rel (0) target = $region5
  $region4: #{infer_model_forward.1} parent=0 // pred_region
    _
  $region5: #{infer_model_forward.1} parent=0 // pred_fallthru
    _
  // Predicated region
  $region6: #{infer_model_forward.1} parent=0 // pred_check
    _
  $region7: #{infer_model_forward.1} parent=0 // pred_check_branch
    %16 = sbr.rel (0) target = $region9
  $region8: #{infer_model_forward.1} parent=0 // pred_region
    _
  $region9: #{infer_model_forward.1} parent=0 // pred_fallthru
    _
  // Predicated region
  $region10: #{infer_model_forward.1} parent=0 // pred_check
    _
  $region11: #{infer_model_forward.1} parent=0 // pred_check_branch
    %18 = sbr.rel (0) target = $region13
  $region12: #{infer_model_forward.1} parent=0 // pred_region
    _
  $region13: #{infer_model_forward.1} parent=0 // pred_fallthru
    _
  // Predicated region
  $region14: #{infer_model_forward.1} parent=0 // pred_check
    _
  $region15: #{infer_model_forward.1} parent=0 // pred_check_branch
    %20 = sbr.rel (0) target = $region17
  $region16: #{infer_model_forward.1} parent=0 // pred_region
    _
  $region17: #{infer_model_forward.1} parent=0 // pred_fallthru
    _
  // Predicated region
  $region18: #{infer_model_forward.1} parent=0 // pred_check
    _
  $region19: #{infer_model_forward.1} parent=0 // pred_check_branch
    %22 = sbr.rel (0) target = $region21
  $region20: #{infer_model_forward.1} parent=0 // pred_region
    _
  $region21: #{infer_model_forward.1} parent=0 // pred_fallthru
    _
  // Predicated region
  $region22: #{infer_model_forward.1} parent=0 // pred_check
    _
  $region23: #{infer_model_forward.1} parent=0 // pred_check_branch
    %24 = sbr.rel (0) target = $region25
  $region24: #{infer_model_forward.1} parent=0 // pred_region
    _
  $region25: #{infer_model_forward.1} parent=0 // pred_fallthru
    _
  %v25 = vld [vmem:[%s2] sm:$0xff]
  %v26 = vld [vmem:[%s2 + $0x8] sm:$0xff]
  %v27 = vld [vmem:[%s2 + $0x10] sm:$0xff]
  %v28 = vld [vmem:[%s2 + $0x18] sm:$0xff]
  %v29 = vld [vmem:[%s2 + $0x20] sm:$0xff]
  %v30 = vld [vmem:[%s2 + $0x28] sm:$0xff]
  %v31 = vld [vmem:[%s2 + $0x30] sm:$0xff]
  %v32 = vld [vmem:[%s2 + $0x38] sm:$0xff]
  %v33 = vld [vmem:[%s2 + $0x40] sm:$0xff]
  %v34 = vld [vmem:[%s2 + $0x48] sm:$0xff]
  %v35 = vld [vmem:[%s2 + $0x50] sm:$0xff]
  %v36 = vld [vmem:[%s2 + $0x58] sm:$0xff]
  %v37 = vld [vmem:[%s2 + $0x60] sm:$0xff]
  %v38 = vld [vmem:[%s2 + $0x68] sm:$0xff]
  %v39 = vld [vmem:[%s2 + $0x70] sm:$0xff]
  %v40 = vld [vmem:[%s2 + $0x78] sm:$0xff]
  %v41 = vld [vmem:[%s3] sm:$0xff]
  %v42 = vld [vmem:[%s3 + $0x8] sm:$0xff]
  %v43 = vld [vmem:[%s3 + $0x10] sm:$0xff]
  %v44 = vld [vmem:[%s3 + $0x18] sm:$0xff]
  %v45 = vld [vmem:[%s4] sm:$0x1]
  %v47 = vperm.slane %v45, 0
  %vm49 = vcmask 261120
  %v51 = vsel %vm49, %v25, 0
  %v54 = vsel %vm49, %v26, 0
  %v57 = vsel %vm49, %v27, 0
  %v60 = vsel %vm49, %v28, 0
  %v63 = vsel %vm49, %v29, 0
  %v66 = vsel %vm49, %v30, 0
  %v69 = vsel %vm49, %v31, 0
  %v72 = vsel %vm49, %v32, 0
  %v75 = vsel %vm49, %v33, 0
  %v78 = vsel %vm49, %v34, 0
  %v81 = vsel %vm49, %v35, 0
  %v84 = vsel %vm49, %v36, 0
  %v87 = vsel %vm49, %v37, 0
  %v90 = vsel %vm49, %v38, 0
  %v93 = vsel %vm49, %v39, 0
  %v96 = vsel %vm49, %v40, 0
  %98 = vmatpush.msra.mxu0 0.0
  %99 = vmatpush.msra.mxu0 0.0
  %100 = vmatpush.msra.mxu0 0.0
  %101 = vmatpush.msra.mxu0 0.0
  %102 = vmatpush.msra.mxu0 0.0
  %103 = vmatpush.msra.mxu0 0.0
  %104 = vmatpush.msra.mxu0 0.0
  %105 = vmatpush.msra.mxu0 0.0
  %106 = vmatpush.msra.mxu0 0.0
  %107 = vmatpush.msra.mxu0 0.0
  %108 = vmatpush.msra.mxu0 0.0
  %109 = vmatpush.msra.mxu0 0.0
  %110 = vmatpush.msra.mxu0 %v44
  %111 = vmatpush.msra.mxu0 %v43
  %112 = vmatpush.msra.mxu0 %v42
  %113 = vmatpush.msra.mxu0 %v41
  %114 = vmatmul.f32.gmra.mxu0 %v51
  %v115 = vpop.f32.mrf.mxu0
  %v116 = vadd.f32 %v47, %v115
  %117 = vmatmul.f32.gmra.mxu0 %v54
  %v118 = vpop.f32.mrf.mxu0
  %v119 = vadd.f32 %v47, %v118
  %120 = vmatmul.f32.gmra.mxu0 %v57
  %v121 = vpop.f32.mrf.mxu0
  %v122 = vadd.f32 %v47, %v121
  %123 = vmatmul.f32.gmra.mxu0 %v60
  %v124 = vpop.f32.mrf.mxu0
  %v125 = vadd.f32 %v47, %v124
  %126 = vmatmul.f32.gmra.mxu0 %v63
  %v127 = vpop.f32.mrf.mxu0
  %v128 = vadd.f32 %v47, %v127
  %129 = vmatmul.f32.gmra.mxu0 %v66
  %v130 = vpop.f32.mrf.mxu0
  %v131 = vadd.f32 %v47, %v130
  %132 = vmatmul.f32.gmra.mxu0 %v69
  %v133 = vpop.f32.mrf.mxu0
  %v134 = vadd.f32 %v47, %v133
  %135 = vmatmul.f32.gmra.mxu0 %v72
  %v136 = vpop.f32.mrf.mxu0
  %v137 = vadd.f32 %v47, %v136
  %138 = vmatmul.f32.gmra.mxu0 %v75
  %v139 = vpop.f32.mrf.mxu0
  %v140 = vadd.f32 %v47, %v139
  %141 = vmatmul.f32.gmra.mxu0 %v78
  %v142 = vpop.f32.mrf.mxu0
  %v143 = vadd.f32 %v47, %v142
  %144 = vmatmul.f32.gmra.mxu0 %v81
  %v145 = vpop.f32.mrf.mxu0
  %v146 = vadd.f32 %v47, %v145
  %147 = vmatmul.f32.gmra.mxu0 %v84
  %v148 = vpop.f32.mrf.mxu0
  %v149 = vadd.f32 %v47, %v148
  %150 = vmatmul.f32.gmra.mxu0 %v87
  %v151 = vpop.f32.mrf.mxu0
  %v152 = vadd.f32 %v47, %v151
  %153 = vmatmul.f32.gmra.mxu0 %v90
  %v154 = vpop.f32.mrf.mxu0
  %v155 = vadd.f32 %v47, %v154
  %156 = vmatmul.f32.gmra.mxu0 %v93
  %v157 = vpop.f32.mrf.mxu0
  %v158 = vadd.f32 %v47, %v157
  %159 = vmatmul.f32.gmra.mxu0 %v96
  %v160 = vpop.f32.mrf.mxu0
  %v161 = vadd.f32 %v47, %v160
  %162 = vdwg.mxu0
  %163 = vst [vmem:[#allocation2] sm:$0xff] %v116
  %164 = vst [vmem:[#allocation2 + $0x8] sm:$0xff] %v119
  %165 = vst [vmem:[#allocation2 + $0x10] sm:$0xff] %v122
  %166 = vst [vmem:[#allocation2 + $0x18] sm:$0xff] %v125
  %167 = vst [vmem:[#allocation2 + $0x20] sm:$0xff] %v128
  %168 = vst [vmem:[#allocation2 + $0x28] sm:$0xff] %v131
  %169 = vst [vmem:[#allocation2 + $0x30] sm:$0xff] %v134
  %170 = vst [vmem:[#allocation2 + $0x38] sm:$0xff] %v137
  %171 = vst [vmem:[#allocation2 + $0x40] sm:$0xff] %v140
  %172 = vst [vmem:[#allocation2 + $0x48] sm:$0xff] %v143
  %173 = vst [vmem:[#allocation2 + $0x50] sm:$0xff] %v146
  %174 = vst [vmem:[#allocation2 + $0x58] sm:$0xff] %v149
  %175 = vst [vmem:[#allocation2 + $0x60] sm:$0xff] %v152
  %176 = vst [vmem:[#allocation2 + $0x68] sm:$0xff] %v155
  %177 = vst [vmem:[#allocation2 + $0x70] sm:$0xff] %v158
  %178 = vst [vmem:[#allocation2 + $0x78] sm:$0xff] %v161
  %v179 = vlaneseq
  %v180 = vand.u32 %v179, 127
  %v181 = vld [vmem:[%s1] sm:$0xff]
  %v182 = vld [vmem:[%s1 + $0x8] sm:$0xff]
  %183 = vset.pattern.permute.xlu0 0
  %184 = vperm.xlu0 %183, %v181
  %v185 = vpop.permute.xlu0 %184
  %186 = vset.pattern.permute.xlu0 0
  %187 = vperm.xlu0 %186, %v182
  %v188 = vpop.permute.xlu0 %187
  %vm189 = vcmp.eq.s32.totalorder %v180, %v185
  %vm190 = vcmp.eq.s32.totalorder %v180, %v188
  %v191 = vsel %vm189, 1, 0
  %v192 = vsel %vm190, 1, 0
  %v193 = vcvt.s32.f32 %v191
  %v194 = vcvt.s32.f32 %v192
  %v195 = vld [vmem:[#allocation2] sm:$0xff]
  %v196 = vld [vmem:[#allocation2 + $0x8] sm:$0xff]
  %v197 = vld [vmem:[#allocation2 + $0x10] sm:$0xff]
  %v198 = vld [vmem:[#allocation2 + $0x18] sm:$0xff]
  %v199 = vld [vmem:[#allocation2 + $0x20] sm:$0xff]
  %v200 = vld [vmem:[#allocation2 + $0x28] sm:$0xff]
  %v201 = vld [vmem:[#allocation2 + $0x30] sm:$0xff]
  %v202 = vld [vmem:[#allocation2 + $0x38] sm:$0xff]
  %v203 = vld [vmem:[#allocation2 + $0x40] sm:$0xff]
  %v204 = vld [vmem:[#allocation2 + $0x48] sm:$0xff]
  %v205 = vld [vmem:[#allocation2 + $0x50] sm:$0xff]
  %v206 = vld [vmem:[#allocation2 + $0x58] sm:$0xff]
  %v207 = vld [vmem:[#allocation2 + $0x60] sm:$0xff]
  %v208 = vld [vmem:[#allocation2 + $0x68] sm:$0xff]
  %v209 = vld [vmem:[#allocation2 + $0x70] sm:$0xff]
  %v210 = vld [vmem:[#allocation2 + $0x78] sm:$0xff]
  %211 = vmatpush.msra.mxu0 %v210
  %212 = vmatpush.msra.mxu0 %v209
  %213 = vmatpush.msra.mxu0 %v208
  %214 = vmatpush.msra.mxu0 %v207
  %215 = vmatpush.msra.mxu0 %v206
  %216 = vmatpush.msra.mxu0 %v205
  %217 = vmatpush.msra.mxu0 %v204
  %218 = vmatpush.msra.mxu0 %v203
  %219 = vmatpush.msra.mxu0 %v202
  %220 = vmatpush.msra.mxu0 %v201
  %221 = vmatpush.msra.mxu0 %v200
  %222 = vmatpush.msra.mxu0 %v199
  %223 = vmatpush.msra.mxu0 %v198
  %224 = vmatpush.msra.mxu0 %v197
  %225 = vmatpush.msra.mxu0 %v196
  %226 = vmatpush.msra.mxu0 %v195
  %227 = vmatmul.f32.gmra.mxu0 %v193
  %v228 = vpop.f32.mrf.mxu0
  %v229 = vadd.f32 0.0, %v228
  %230 = vmatmul.f32.gmra.mxu0 %v194
  %v231 = vpop.f32.mrf.mxu0
  %v232 = vadd.f32 0.0, %v231
  %233 = vdwg.mxu0
  %234 = vst [vmem:[%s7] sm:$0xff] %v229
  %235 = vst [vmem:[%s7 + $0xb] sm:$0xff] %v232
  %v236 = vld [vmem:[%s0] sm:$0x3]
  %237 = vset.pattern.permute.xlu0 7
  %238 = vperm.xlu0 %237, %v236
  %v239 = vpop.permute.xlu0 %238
  %vm240 = vcmp.eq.s32.totalorder %v180, %v239
  %v241 = vsel %vm240, 1, 0
  %v242 = vcvt.s32.f32 %v241
  %v243 = vld [vmem:[#allocation2] sm:$0xff]
  %v244 = vld [vmem:[#allocation2 + $0x8] sm:$0xff]
  %v245 = vld [vmem:[#allocation2 + $0x10] sm:$0xff]
  %v246 = vld [vmem:[#allocation2 + $0x18] sm:$0xff]
  %v247 = vld [vmem:[#allocation2 + $0x20] sm:$0xff]
  %v248 = vld [vmem:[#allocation2 + $0x28] sm:$0xff]
  %v249 = vld [vmem:[#allocation2 + $0x30] sm:$0xff]
  %v250 = vld [vmem:[#allocation2 + $0x38] sm:$0xff]
  %v251 = vld [vmem:[#allocation2 + $0x40] sm:$0xff]
  %v252 = vld [vmem:[#allocation2 + $0x48] sm:$0xff]
  %v253 = vld [vmem:[#allocation2 + $0x50] sm:$0xff]
  %v254 = vld [vmem:[#allocation2 + $0x58] sm:$0xff]
  %v255 = vld [vmem:[#allocation2 + $0x60] sm:$0xff]
  %v256 = vld [vmem:[#allocation2 + $0x68] sm:$0xff]
  %v257 = vld [vmem:[#allocation2 + $0x70] sm:$0xff]
  %v258 = vld [vmem:[#allocation2 + $0x78] sm:$0xff]
  %259 = vmatpush.msra.mxu0 %v258
  %260 = vmatpush.msra.mxu0 %v257
  %261 = vmatpush.msra.mxu0 %v256
  %262 = vmatpush.msra.mxu0 %v255
  %263 = vmatpush.msra.mxu0 %v254
  %264 = vmatpush.msra.mxu0 %v253
  %265 = vmatpush.msra.mxu0 %v252
  %266 = vmatpush.msra.mxu0 %v251
  %267 = vmatpush.msra.mxu0 %v250
  %268 = vmatpush.msra.mxu0 %v249
  %269 = vmatpush.msra.mxu0 %v248
  %270 = vmatpush.msra.mxu0 %v247
  %271 = vmatpush.msra.mxu0 %v246
  %272 = vmatpush.msra.mxu0 %v245
  %273 = vmatpush.msra.mxu0 %v244
  %274 = vmatpush.msra.mxu0 %v243
  %275 = vmatmul.f32.gmra.mxu0 %v242
  %v276 = vpop.f32.mrf.mxu0
  %v277 = vadd.f32 0.0, %v276
  %278 = vdwg.mxu0
  %279 = vst [vmem:[%s7 + $0x7] sm:$0x1] %v277
  %280 = vst [vmem:[%s7 + $0x11] sm:$0x2] %v277
  %v281 = vld [vmem:[%s5] sm:$0x3]
  %v282 = vadd.f32 %v277, %v281
  %vm283 = vcmask 1041408
  %v284 = vsel %vm283, %v282, -inf
  %285 = vmax.xlane.f32.xlu0 %v284
  %v286 = vpop.xlane.xlu0 %285
  %vm287 = vcmp.ge.f32.partialorder %v282, %v286
  %v288 = vsel %vm287, %v180, 128
  %v289 = vsel %vm283, %v288, 2147483647
  %v290 = vand.u32 %v289, 65535
  %v291 = vshra.s32 %v289, 16
  %v292 = vcvt.s32.f32 %v290
  %v293 = vcvt.s32.f32 %v291
  %294 = vmin.xlane.f32.xlu0 %v293
  %v295 = vpop.xlane.xlu0 %294
  %vm296 = vcmp.eq.f32.partialorder %v293, %v295
  %v297 = vsel %vm296, %v292, inf
  %298 = vmin.xlane.f32.xlu0 %v297
  %v299 = vpop.xlane.xlu0 %298
  %v300 = vcvt.f32.s32 %v299
  %v301 = vcvt.f32.s32 %v295
  %v302 = vshll.u32 %v301, 16
  %v303 = vadd.s32 %v302, %v300
  %vm304 = vcmask 0
  %305 = vst.msk [vmem:[%s6] sm:$0x1] %vm304, %v303
  %vm306 = vcmask 1025
  %307 = vst.msk [vmem:[%s6 + $0x3] sm:$0x2] %vm306, %v303
  %vm308 = vcmp.eq.s32.totalorder %v180, %v303
  %v309 = vsel %vm308, 1, 0
  %v310 = vcvt.s32.f32 %v309
  %v311 = vld [vmem:[#allocation2] sm:$0xff]
  %v312 = vld [vmem:[#allocation2 + $0x8] sm:$0xff]
  %v313 = vld [vmem:[#allocation2 + $0x10] sm:$0xff]
  %v314 = vld [vmem:[#allocation2 + $0x18] sm:$0xff]
  %v315 = vld [vmem:[#allocation2 + $0x20] sm:$0xff]
  %v316 = vld [vmem:[#allocation2 + $0x28] sm:$0xff]
  %v317 = vld [vmem:[#allocation2 + $0x30] sm:$0xff]
  %v318 = vld [vmem:[#allocation2 + $0x38] sm:$0xff]
  %v319 = vld [vmem:[#allocation2 + $0x40] sm:$0xff]
  %v320 = vld [vmem:[#allocation2 + $0x48] sm:$0xff]
  %v321 = vld [vmem:[#allocation2 + $0x50] sm:$0xff]
  %v322 = vld [vmem:[#allocation2 + $0x58] sm:$0xff]
  %v323 = vld [vmem:[#allocation2 + $0x60] sm:$0xff]
  %v324 = vld [vmem:[#allocation2 + $0x68] sm:$0xff]
  %v325 = vld [vmem:[#allocation2 + $0x70] sm:$0xff]
  %v326 = vld [vmem:[#allocation2 + $0x78] sm:$0xff]
  %327 = vmatpush.msra.mxu0 %v326
  %328 = vmatpush.msra.mxu0 %v325
  %329 = vmatpush.msra.mxu0 %v324
  %330 = vmatpush.msra.mxu0 %v323
  %331 = vmatpush.msra.mxu0 %v322
  %332 = vmatpush.msra.mxu0 %v321
  %333 = vmatpush.msra.mxu0 %v320
  %334 = vmatpush.msra.mxu0 %v319
  %335 = vmatpush.msra.mxu0 %v318
  %336 = vmatpush.msra.mxu0 %v317
  %337 = vmatpush.msra.mxu0 %v316
  %338 = vmatpush.msra.mxu0 %v315
  %339 = vmatpush.msra.mxu0 %v314
  %340 = vmatpush.msra.mxu0 %v313
  %341 = vmatpush.msra.mxu0 %v312
  %342 = vmatpush.msra.mxu0 %v311
  %343 = vmatmul.f32.gmra.mxu0 %v310
  %v344 = vpop.f32.mrf.mxu0
  %v345 = vadd.f32 0.0, %v344
  %346 = vdwg.mxu0
  %347 = vst [vmem:[%s7 + $0x8] sm:$0x1] %v345
  %348 = vst [vmem:[%s7 + $0x12] sm:$0x2] %v345
  %v349 = vld [vmem:[%s5 + $0x2] sm:$0x3]
  %v350 = vadd.f32 %v345, %v349
  %v351 = vsel %vm283, %v350, -inf
  %352 = vmax.xlane.f32.xlu0 %v351
  %v353 = vpop.xlane.xlu0 %352
  %vm354 = vcmp.ge.f32.partialorder %v350, %v353
  %v355 = vsel %vm354, %v180, 128
  %v356 = vsel %vm283, %v355, 2147483647
  %v357 = vand.u32 %v356, 65535
  %v358 = vshra.s32 %v356, 16
  %v359 = vcvt.s32.f32 %v357
  %v360 = vcvt.s32.f32 %v358
  %361 = vmin.xlane.f32.xlu0 %v360
  %v362 = vpop.xlane.xlu0 %361
  %vm363 = vcmp.eq.f32.partialorder %v360, %v362
  %v364 = vsel %vm363, %v359, inf
  %365 = vmin.xlane.f32.xlu0 %v364
  %v366 = vpop.xlane.xlu0 %365
  %v367 = vcvt.f32.s32 %v366
  %v368 = vcvt.f32.s32 %v362
  %v369 = vshll.u32 %v368, 16
  %v370 = vadd.s32 %v369, %v367
  %371 = vst.msk [vmem:[%s6 + $0x1] sm:$0x1] %vm304, %v370
  %372 = vst.msk [vmem:[%s6 + $0x4] sm:$0x2] %vm306, %v370
  %vm373 = vcmp.eq.s32.totalorder %v180, %v370
  %v374 = vsel %vm373, 1, 0
  %v375 = vcvt.s32.f32 %v374
  %v376 = vld [vmem:[#allocation2] sm:$0xff]
  %v377 = vld [vmem:[#allocation2 + $0x8] sm:$0xff]
  %v378 = vld [vmem:[#allocation2 + $0x10] sm:$0xff]
  %v379 = vld [vmem:[#allocation2 + $0x18] sm:$0xff]
  %v380 = vld [vmem:[#allocation2 + $0x20] sm:$0xff]
  %v381 = vld [vmem:[#allocation2 + $0x28] sm:$0xff]
  %v382 = vld [vmem:[#allocation2 + $0x30] sm:$0xff]
  %v383 = vld [vmem:[#allocation2 + $0x38] sm:$0xff]
  %v384 = vld [vmem:[#allocation2 + $0x40] sm:$0xff]
  %v385 = vld [vmem:[#allocation2 + $0x48] sm:$0xff]
  %v386 = vld [vmem:[#allocation2 + $0x50] sm:$0xff]
  %v387 = vld [vmem:[#allocation2 + $0x58] sm:$0xff]
  %v388 = vld [vmem:[#allocation2 + $0x60] sm:$0xff]
  %v389 = vld [vmem:[#allocation2 + $0x68] sm:$0xff]
  %v390 = vld [vmem:[#allocation2 + $0x70] sm:$0xff]
  %v391 = vld [vmem:[#allocation2 + $0x78] sm:$0xff]
  %392 = vmatpush.msra.mxu0 %v391
  %393 = vmatpush.msra.mxu0 %v390
  %394 = vmatpush.msra.mxu0 %v389
  %395 = vmatpush.msra.mxu0 %v388
  %396 = vmatpush.msra.mxu0 %v387
  %397 = vmatpush.msra.mxu0 %v386
  %398 = vmatpush.msra.mxu0 %v385
  %399 = vmatpush.msra.mxu0 %v384
  %400 = vmatpush.msra.mxu0 %v383
  %401 = vmatpush.msra.mxu0 %v382
  %402 = vmatpush.msra.mxu0 %v381
  %403 = vmatpush.msra.mxu0 %v380
  %404 = vmatpush.msra.mxu0 %v379
  %405 = vmatpush.msra.mxu0 %v378
  %406 = vmatpush.msra.mxu0 %v377
  %407 = vmatpush.msra.mxu0 %v376
  %408 = vmatmul.f32.gmra.mxu0 %v375
  %v409 = vpop.f32.mrf.mxu0
  %v410 = vadd.f32 0.0, %v409
  %411 = vdwg.mxu0
  %412 = vst [vmem:[%s7 + $0x9] sm:$0x1] %v410
  %413 = vst [vmem:[%s7 + $0x13] sm:$0x2] %v410
  %v414 = vld [vmem:[%s5 + $0x4] sm:$0x3]
  %v415 = vadd.f32 %v410, %v414
  %v416 = vsel %vm283, %v415, -inf
  %417 = vmax.xlane.f32.xlu0 %v416
  %v418 = vpop.xlane.xlu0 %417
  %vm419 = vcmp.ge.f32.partialorder %v415, %v418
  %v420 = vsel %vm419, %v180, 128
  %v421 = vsel %vm283, %v420, 2147483647
  %v422 = vand.u32 %v421, 65535
  %v423 = vshra.s32 %v421, 16
  %v424 = vcvt.s32.f32 %v422
  %v425 = vcvt.s32.f32 %v423
  %426 = vmin.xlane.f32.xlu0 %v425
  %v427 = vpop.xlane.xlu0 %426
  %vm428 = vcmp.eq.f32.partialorder %v425, %v427
  %v429 = vsel %vm428, %v424, inf
  %430 = vmin.xlane.f32.xlu0 %v429
  %v431 = vpop.xlane.xlu0 %430
  %v432 = vcvt.f32.s32 %v431
  %v433 = vcvt.f32.s32 %v427
  %v434 = vshll.u32 %v433, 16
  %v435 = vadd.s32 %v434, %v432
  %436 = vst.msk [vmem:[%s6 + $0x2] sm:$0x1] %vm304, %v435
  %437 = vst.msk [vmem:[%s6 + $0x5] sm:$0x2] %vm306, %v435
  %vm438 = vcmp.eq.s32.totalorder %v180, %v435
  %v439 = vsel %vm438, 1, 0
  %v440 = vcvt.s32.f32 %v439
  %v441 = vld [vmem:[#allocation2] sm:$0xff]
  %v442 = vld [vmem:[#allocation2 + $0x8] sm:$0xff]
  %v443 = vld [vmem:[#allocation2 + $0x10] sm:$0xff]
  %v444 = vld [vmem:[#allocation2 + $0x18] sm:$0xff]
  %v445 = vld [vmem:[#allocation2 + $0x20] sm:$0xff]
  %v446 = vld [vmem:[#allocation2 + $0x28] sm:$0xff]
  %v447 = vld [vmem:[#allocation2 + $0x30] sm:$0xff]
  %v448 = vld [vmem:[#allocation2 + $0x38] sm:$0xff]
  %v449 = vld [vmem:[#allocation2 + $0x40] sm:$0xff]
  %v450 = vld [vmem:[#allocation2 + $0x48] sm:$0xff]
  %v451 = vld [vmem:[#allocation2 + $0x50] sm:$0xff]
  %v452 = vld [vmem:[#allocation2 + $0x58] sm:$0xff]
  %v453 = vld [vmem:[#allocation2 + $0x60] sm:$0xff]
  %v454 = vld [vmem:[#allocation2 + $0x68] sm:$0xff]
  %v455 = vld [vmem:[#allocation2 + $0x70] sm:$0xff]
  %v456 = vld [vmem:[#allocation2 + $0x78] sm:$0xff]
  %457 = vmatpush.msra.mxu0 %v456
  %458 = vmatpush.msra.mxu0 %v455
  %459 = vmatpush.msra.mxu0 %v454
  %460 = vmatpush.msra.mxu0 %v453
  %461 = vmatpush.msra.mxu0 %v452
  %462 = vmatpush.msra.mxu0 %v451
  %463 = vmatpush.msra.mxu0 %v450
  %464 = vmatpush.msra.mxu0 %v449
  %465 = vmatpush.msra.mxu0 %v448
  %466 = vmatpush.msra.mxu0 %v447
  %467 = vmatpush.msra.mxu0 %v446
  %468 = vmatpush.msra.mxu0 %v445
  %469 = vmatpush.msra.mxu0 %v444
  %470 = vmatpush.msra.mxu0 %v443
  %471 = vmatpush.msra.mxu0 %v442
  %472 = vmatpush.msra.mxu0 %v441
  %473 = vmatmul.f32.gmra.mxu0 %v440
  %v474 = vpop.f32.mrf.mxu0
  %v475 = vadd.f32 0.0, %v474
  %476 = vdwg.mxu0
  %477 = vst [vmem:[%s7 + $0xa] sm:$0x1] %v475
  %478 = vst [vmem:[%s7 + $0x14] sm:$0x2] %v475
  %v479 = vld [vmem:[%s5 + $0x6] sm:$0x3]
  %v480 = vadd.f32 %v475, %v479
  %v481 = vsel %vm283, %v480, -inf
  %482 = vmax.xlane.f32.xlu0 %v481
  %v483 = vpop.xlane.xlu0 %482
  %vm484 = vcmp.ge.f32.partialorder %v480, %v483
  %v485 = vsel %vm484, %v180, 128
  %v486 = vsel %vm283, %v485, 2147483647
  %v487 = vand.u32 %v486, 65535
  %v488 = vshra.s32 %v486, 16
  %v489 = vcvt.s32.f32 %v487
  %v490 = vcvt.s32.f32 %v488
  %491 = vmin.xlane.f32.xlu0 %v490
  %v492 = vpop.xlane.xlu0 %491
  %vm493 = vcmp.eq.f32.partialorder %v490, %v492
  %v494 = vsel %vm493, %v489, inf
  %495 = vmin.xlane.f32.xlu0 %v494
  %v496 = vpop.xlane.xlu0 %495
  %v497 = vcvt.f32.s32 %v496
  %v498 = vcvt.f32.s32 %v492
  %v499 = vshll.u32 %v498, 16
  %v500 = vadd.s32 %v499, %v497
  %501 = vst.msk [vmem:[%s6 + $0x3] sm:$0x1] %vm304, %v500
  %502 = vst.msk [vmem:[%s6 + $0x6] sm:$0x2] %vm306, %v500
  // Predicated region
  $region26: #{infer_model_forward.1} parent=0 // pred_check
    _
  $region27: #{infer_model_forward.1} parent=0 // pred_check_branch
    %504 = sbr.rel (0) target = $region29
  $region28: #{infer_model_forward.1} parent=0 // pred_region
    _
  $region29: #{infer_model_forward.1} parent=0 // pred_fallthru
    _
  // Predicated region
  $region30: #{infer_model_forward.1} parent=0 // pred_check
    _
  $region31: #{infer_model_forward.1} parent=0 // pred_check_branch
    %506 = sbr.rel (0) target = $region33
  $region32: #{infer_model_forward.1} parent=0 // pred_region
    _
  $region33: #{infer_model_forward.1} parent=0 // pred_fallthru
    _
  // Predicated region
  $region34: #{infer_model_forward.1} parent=0 // pred_check
    _
  $region35: #{infer_model_forward.1} parent=0 // pred_check_branch
    %508 = sbr.rel (0) target = $region37
  $region36: #{infer_model_forward.1} parent=0 // pred_region
    _
  $region37: #{infer_model_forward.1} parent=0 // pred_fallthru
    _
  // Predicated region
  $region38: #{infer_model_forward.1} parent=0 // pred_check
    _
  $region39: #{infer_model_forward.1} parent=0 // pred_check_branch
    %510 = sbr.rel (0) target = $region41
  $region40: #{infer_model_forward.1} parent=0 // pred_region
    _
  $region41: #{infer_model_forward.1} parent=0 // pred_fallthru
    _

</llo_original>
